<compile_context>
chip_gen: v7x
topology: tpu7x:2x2x1
jax: 0.10.0
libtpu: 0.0.40
codegen_flags: <defaults>
</compile_context>

<pallas_src>
import functools

import jax
import jax.numpy as jnp
from jax.experimental import pallas as pl
from jax.experimental.pallas import tpu as pltpu

IN_FEATURES = 2      # Linear(2, width)
OUT_FEATURES = 2     # Linear(width, 2)
OUT_PAD = 8          # pad the 2 output rows to one sublane group for the MXU
MAX_TILE_N = 4096    # batch-lane tile: (width_pad, 4096) f32 h^T plus the
                     # double-buffered (2, 4096) in/out tiles stay far below
                     # the 16/32/32 MiB scoped-VMEM defaults on v5e/v6e/v7x.


def _round_up(x, m):
    return ((x + m - 1) // m) * m


def _neuralf_kernel(s_ref, xT_ref, w1T_ref, b1_ref, w2T_ref, b2_ref, oT_ref,
                    *, oscillate):
    # s_ref:   (1, 1)         SMEM, precomputed sin(20*t)
    # xT_ref:  (2, TILE_N)    input points, batch on lanes
    # w1T_ref: (W8, 2)        W1^T, width padded to a multiple of 8
    # b1_ref:  (W8, 1)
    # w2T_ref: (OUT_PAD, W8)  W2^T, output rows padded 2 -> 8
    # b2_ref:  (OUT_PAD, 1)
    # oT_ref:  (2, TILE_N)    output, batch on lanes (lane-dense store)
    xT = xT_ref[...]
    w1T = w1T_ref[...]

    # Layer 1: in_features == 2, so the contraction is two broadcast FMAs on
    # the VPU (an MXU matmul here would multiply almost entirely zeros).
    hT = (w1T[:, 0:1] * xT[0:1, :]
          + w1T[:, 1:2] * xT[1:2, :]
          + b1_ref[...])                       # (W8, TILE_N)
    hT = jnp.tanh(hT)

    # Layer 2: the real contraction (K = W8) on the MXU, f32 accumulate.
    outT = jnp.dot(w2T_ref[...], hT,
                   preferred_element_type=jnp.float32) + b2_ref[...]
    outT = jnp.tanh(outT)                      # (OUT_PAD, TILE_N)

    out2 = outT[0:OUT_FEATURES, :]             # (2, TILE_N)
    if oscillate:
        out2 = out2 * s_ref[0, 0]
    oT_ref[...] = out2.astype(oT_ref.dtype)


def prepare_params(w1, b1, w2, b2):
    """Pad + transpose parameters once (hoisted out of the per-call path).

    w1: (2, width), b1: (width,), w2: (width, 2), b2: (2,)   with y = x @ W + b.
    Any width is supported; VMEM use of h^T grows as width_pad * TILE_N * 4 B.
    """
    in_f, width = w1.shape
    assert in_f == IN_FEATURES and w2.shape == (width, OUT_FEATURES)
    assert b1.shape == (width,) and b2.shape == (OUT_FEATURES,)
    w8 = _round_up(max(width, 8), 8)
    w1T = jnp.zeros((w8, IN_FEATURES), jnp.float32).at[:width, :].set(w1.T)
    b1c = jnp.zeros((w8, 1), jnp.float32).at[:width, 0].set(b1)
    w2T = jnp.zeros((OUT_PAD, w8), jnp.float32).at[:OUT_FEATURES, :width].set(w2.T)
    b2c = jnp.zeros((OUT_PAD, 1), jnp.float32).at[:OUT_FEATURES, 0].set(b2)
    return w1T, b1c, w2T, b2c


def neural_f_forward(t, x, padded_params, *, oscillate):
    """x: (N, 2) f32; padded_params from prepare_params(); returns (N, 2) f32."""
    w1T, b1c, w2T, b2c = padded_params
    n, in_f = x.shape
    assert in_f == IN_FEATURES
    w8 = w1T.shape[0]

    tile_n = min(MAX_TILE_N, _round_up(n, 128))
    n_pad = _round_up(n, tile_n)
    grid = (n_pad // tile_n,)

    # Batch on lanes: (2, n_pad).  Padded columns are zero; their (garbage)
    # outputs are sliced off below and never reduced over.
    xT = jnp.zeros((IN_FEATURES, n_pad), jnp.float32).at[:, :n].set(x.T)

    # Precompute the oscillation scale once (not once per grid step).
    if oscillate:
        scale = jnp.sin(jnp.asarray(t, jnp.float32) * 20.0).reshape(1, 1)
    else:
        scale = jnp.ones((1, 1), jnp.float32)

    kernel = functools.partial(_neuralf_kernel, oscillate=oscillate)

    outT = pl.pallas_call(
        kernel,
        out_shape=jax.ShapeDtypeStruct((OUT_FEATURES, n_pad), jnp.float32),
        grid=grid,
        in_specs=[
            pl.BlockSpec(memory_space=pltpu.SMEM),                    # sin(20t)
            pl.BlockSpec((IN_FEATURES, tile_n), lambda i: (0, i)),    # x^T tile
            pl.BlockSpec((w8, IN_FEATURES), lambda i: (0, 0)),        # W1^T (resident)
            pl.BlockSpec((w8, 1), lambda i: (0, 0)),                  # b1 (resident)
            pl.BlockSpec((OUT_PAD, w8), lambda i: (0, 0)),            # W2^T (resident)
            pl.BlockSpec((OUT_PAD, 1), lambda i: (0, 0)),             # b2 (resident)
        ],
        out_specs=pl.BlockSpec((OUT_FEATURES, tile_n), lambda i: (0, i)),
        compiler_params=pltpu.CompilerParams(
            dimension_semantics=("parallel",)),
    )(scale, xT, w1T, b1c, w2T, b2c)

    return outT[:, :n].T


def _reference(t, x, w1, b1, w2, b2, oscillate):
    # Layer 1 written as explicit FMAs (in_features == 2), mathematically the
    # same Linear and numerically mirroring the kernel's VPU path.
    h = jnp.tanh(x[:, 0:1] * w1[0:1, :] + x[:, 1:2] * w1[1:2, :] + b1)
    out = jnp.tanh(h @ w2 + b2)
    if oscillate:
        out = out * jnp.sin(t * 20.0)
    return out


if __name__ == "__main__":
    key = jax.random.PRNGKey(0)
    k_x, k_w1, k_b1, k_w2, k_b2 = jax.random.split(key, 5)

    width = 32       # _NeuralF(width=32, oscillate=True)
    oscillate = True
    n = 8            # batch of points, each with 2 features

    x = jax.random.normal(k_x, (n, IN_FEATURES), jnp.float32)
    t = jnp.float32(0.37)

    # Deterministic parameter init (torch.nn.Linear-style uniform bounds).
    def uinit(k, shape, fan_in):
        bound = 1.0 / jnp.sqrt(fan_in)
        return jax.random.uniform(k, shape, jnp.float32, -bound, bound)

    w1 = uinit(k_w1, (IN_FEATURES, width), IN_FEATURES)      # (2, width)
    b1 = uinit(k_b1, (width,), IN_FEATURES)
    w2 = uinit(k_w2, (width, OUT_FEATURES), width)            # (width, 2)
    b2 = uinit(k_b2, (OUT_FEATURES,), width)

    # Padding/transpose hoisted out of the forward path (done once).
    params = prepare_params(w1, b1, w2, b2)

    out = neural_f_forward(t, x, params, oscillate=oscillate)
    out = jax.block_until_ready(out)

    ref = _reference(t, x, w1, b1, w2, b2, oscillate)
    assert out.shape == (n, OUT_FEATURES)
    assert jnp.allclose(out, ref, atol=1e-5, rtol=1e-5)

    print("KERNEL_OK")
</pallas_src>

<mosaic_0001>
module attributes {stable_mosaic.version = 11 : i64} {
  func.func @_neuralf_kernel(%arg0: i32, %arg1: memref<1x1xf32, #tpu.memory_space<smem>>, %arg2: memref<2x128xf32, #tpu.memory_space<vmem>>, %arg3: memref<32x2xf32, #tpu.memory_space<vmem>>, %arg4: memref<32x1xf32, #tpu.memory_space<vmem>>, %arg5: memref<8x32xf32, #tpu.memory_space<vmem>>, %arg6: memref<8x1xf32, #tpu.memory_space<vmem>>, %arg7: memref<2x128xf32, #tpu.memory_space<vmem>>) attributes {dimension_semantics = [#tpu.dimension_semantics<parallel>], iteration_bounds = array<i64: 1>, scalar_prefetch = 0 : i64, scratch_operands = 0 : i64, tpu.core_type = #tpu.core_type<tc>, window_params = [{transform_indices = @transform_0, window_bounds = array<i64: 1, 1>}, {transform_indices = @transform_1, window_bounds = array<i64: 2, 128>}, {pipeline_mode = #tpu.pipeline_mode<synchronous>, transform_indices = @transform_2, window_bounds = array<i64: 32, 2>}, {pipeline_mode = #tpu.pipeline_mode<synchronous>, transform_indices = @transform_3, window_bounds = array<i64: 32, 1>}, {pipeline_mode = #tpu.pipeline_mode<synchronous>, transform_indices = @transform_4, window_bounds = array<i64: 8, 32>}, {pipeline_mode = #tpu.pipeline_mode<synchronous>, transform_indices = @transform_5, window_bounds = array<i64: 8, 1>}, {transform_indices = @transform_6, window_bounds = array<i64: 2, 128>}]} {
    %c0 = arith.constant 0 : index
    %c0_0 = arith.constant 0 : index
    %0 = vector.load %arg2[%c0, %c0_0] : memref<2x128xf32, #tpu.memory_space<vmem>>, vector<2x128xf32>
    %c0_1 = arith.constant 0 : index
    %c0_2 = arith.constant 0 : index
    %1 = vector.load %arg3[%c0_1, %c0_2] : memref<32x2xf32, #tpu.memory_space<vmem>>, vector<32x2xf32>
    %2 = vector.extract_strided_slice %1 {offsets = [0, 0], sizes = [32, 1], strides = [1, 1]} : vector<32x2xf32> to vector<32x1xf32>
    %3 = vector.extract_strided_slice %0 {offsets = [0, 0], sizes = [1, 128], strides = [1, 1]} : vector<2x128xf32> to vector<1x128xf32>
    %4 = vector.broadcast %2 : vector<32x1xf32> to vector<32x128xf32>
    %5 = vector.broadcast %3 : vector<1x128xf32> to vector<32x128xf32>
    %6 = arith.mulf %4, %5 : vector<32x128xf32>
    %7 = vector.extract_strided_slice %1 {offsets = [0, 1], sizes = [32, 1], strides = [1, 1]} : vector<32x2xf32> to vector<32x1xf32>
    %8 = vector.extract_strided_slice %0 {offsets = [1, 0], sizes = [1, 128], strides = [1, 1]} : vector<2x128xf32> to vector<1x128xf32>
    %9 = vector.broadcast %7 : vector<32x1xf32> to vector<32x128xf32>
    %10 = vector.broadcast %8 : vector<1x128xf32> to vector<32x128xf32>
    %11 = arith.mulf %9, %10 : vector<32x128xf32>
    %12 = arith.addf %6, %11 : vector<32x128xf32>
    %c0_3 = arith.constant 0 : index
    %c0_4 = arith.constant 0 : index
    %13 = vector.load %arg4[%c0_3, %c0_4] : memref<32x1xf32, #tpu.memory_space<vmem>>, vector<32x1xf32>
    %14 = vector.broadcast %13 : vector<32x1xf32> to vector<32x128xf32>
    %15 = arith.addf %12, %14 : vector<32x128xf32>
    %16 = math.tanh %15 : vector<32x128xf32>
    %c0_5 = arith.constant 0 : index
    %c0_6 = arith.constant 0 : index
    %17 = vector.load %arg5[%c0_5, %c0_6] : memref<8x32xf32, #tpu.memory_space<vmem>>, vector<8x32xf32>
    %cst = arith.constant dense<0.000000e+00> : vector<8x128xf32>
    %18 = tpu.matmul %17, %16, %cst {dimension_numbers = #tpu.dot_dimension_numbers<[1], [0], [0], [1], [0, 0, 1, 1], [], []>} : vector<8x32xf32>, vector<32x128xf32>, vector<8x128xf32> -> vector<8x128xf32>
    %c0_7 = arith.constant 0 : index
    %c0_8 = arith.constant 0 : index
    %19 = vector.load %arg6[%c0_7, %c0_8] : memref<8x1xf32, #tpu.memory_space<vmem>>, vector<8x1xf32>
    %20 = vector.broadcast %19 : vector<8x1xf32> to vector<8x128xf32>
    %21 = arith.addf %18, %20 : vector<8x128xf32>
    %22 = math.tanh %21 : vector<8x128xf32>
    %23 = vector.extract_strided_slice %22 {offsets = [0, 0], sizes = [2, 128], strides = [1, 1]} : vector<8x128xf32> to vector<2x128xf32>
    %c0_9 = arith.constant 0 : index
    %c0_10 = arith.constant 0 : index
    %24 = memref.load %arg1[%c0_9, %c0_10] : memref<1x1xf32, #tpu.memory_space<smem>>
    %25 = vector.broadcast %24 : f32 to vector<2x128xf32>
    %26 = arith.mulf %23, %25 : vector<2x128xf32>
    %c0_11 = arith.constant 0 : index
    %c0_12 = arith.constant 0 : index
    %27 = vector.load %arg7[%c0_11, %c0_12] : memref<2x128xf32, #tpu.memory_space<vmem>>, vector<2x128xf32>
    tpu.vector_store %arg7[%c0_11, %c0_12], %26 {strides = array<i32>} : memref<2x128xf32, #tpu.memory_space<vmem>>, vector<2x128xf32>,
    return
  }
  func.func @transform_0(%arg0: i32) -> (i32, i32) {
    %c0_i32 = arith.constant 0 : i32
    %c0_i32_0 = arith.constant 0 : i32
    %c0_i32_1 = arith.constant 0 : i32
    return %c0_i32, %c0_i32_0 : i32, i32
  }
  func.func @transform_1(%arg0: i32) -> (i32, i32) {
    %c0_i32 = arith.constant 0 : i32
    %c0_i32_0 = arith.constant 0 : i32
    return %c0_i32, %arg0 : i32, i32
  }
  func.func @transform_2(%arg0: i32) -> (i32, i32) {
    %c0_i32 = arith.constant 0 : i32
    %c0_i32_0 = arith.constant 0 : i32
    %c0_i32_1 = arith.constant 0 : i32
    return %c0_i32, %c0_i32_0 : i32, i32
  }
  func.func @transform_3(%arg0: i32) -> (i32, i32) {
    %c0_i32 = arith.constant 0 : i32
    %c0_i32_0 = arith.constant 0 : i32
    %c0_i32_1 = arith.constant 0 : i32
    return %c0_i32, %c0_i32_0 : i32, i32
  }
  func.func @transform_4(%arg0: i32) -> (i32, i32) {
    %c0_i32 = arith.constant 0 : i32
    %c0_i32_0 = arith.constant 0 : i32
    %c0_i32_1 = arith.constant 0 : i32
    return %c0_i32, %c0_i32_0 : i32, i32
  }
  func.func @transform_5(%arg0: i32) -> (i32, i32) {
    %c0_i32 = arith.constant 0 : i32
    %c0_i32_0 = arith.constant 0 : i32
    %c0_i32_1 = arith.constant 0 : i32
    return %c0_i32, %c0_i32_0 : i32, i32
  }
  func.func @transform_6(%arg0: i32) -> (i32, i32) {
    %c0_i32 = arith.constant 0 : i32
    %c0_i32_0 = arith.constant 0 : i32
    return %c0_i32, %arg0 : i32, i32
  }
}

</mosaic_0001>

<llo_original>
// kernel: tpu_custom_call.1
$region0: #{tpu_custom_call.1}
  #allocation0 [shape = 'u32[]', space=smem, size = 0x4, offset = 0x4, fixed_abs, tag = 'smem constant byte address 0x4 - core index']
  #allocation1 [shape = 'u32[144,128]{1,0:T(1,128)}', space=vmem, size = 0x12000, scoped, tag = 'internal scratch']
  #allocation2 [shape = 'f32[1,1]{1,0:T(1,128)S(6)}', space=smem, size = 0x200, scoped, tag = 'scoped memory for tpu_custom_call.1']
  %s0 = inlined_call_operand.<no memory space> [shape: f32[1,1], index: 0, kind: input, shape index: {}]
  %s1 = inlined_call_operand.vmem [shape: f32[2,128], index: 1, kind: input, shape index: {}]
  %s2 = inlined_call_operand.vmem [shape: f32[32,2], index: 2, kind: input, shape index: {}]
  %s3 = inlined_call_operand.vmem [shape: f32[32,1], index: 3, kind: input, shape index: {}]
  %s4 = inlined_call_operand.vmem [shape: f32[8,32], index: 4, kind: input, shape index: {}]
  %s5 = inlined_call_operand.vmem [shape: f32[8,1], index: 5, kind: input, shape index: {}]
  %s6 = inlined_call_operand.hbm [shape: f32[2,128], index: 6, kind: output, shape index: {}]
  %s7 = sld [smem:[#allocation0]]
  $region34: #{tpu_custom_call.1} parent=0
    _
  %s9 = ssub.s32 1, %s7
  %s10 = scalar_select 0, %s9, %s7
  %11 = sst [smem:[#allocation2]] %s0
  $region1: #{tpu_custom_call.1} parent=0
    #allocation3 [shape = 'u8[1024]{0}', space=vmem, size = 0x400, scoped, tag = 'output window, operand 0, single buffered']
    #allocation4 [shape = 's32[1]{0}', space=sflag, size = 0x4, scoped, tag = 'scoped memory for tpu_custom_call.1']
    %12 = vsyncpa [#allocation4], 0
    // Predicated region
    $region2: #{tpu_custom_call.1} parent=1 // pred_check
      _
    $region3: #{tpu_custom_call.1} parent=1 // pred_check_branch
      %14 = sbr.rel (0) target = $region5
    $region4: #{tpu_custom_call.1} parent=1 // pred_region
      _
    $region5: #{tpu_custom_call.1} parent=1 // pred_fallthru
      _
    // Predicated region
    $region6: #{tpu_custom_call.1} parent=1 // pred_check
      _
    $region7: #{tpu_custom_call.1} parent=1 // pred_check_branch
      %16 = sbr.rel (0) target = $region9
    $region8: #{tpu_custom_call.1} parent=1 // pred_region
      _
    $region9: #{tpu_custom_call.1} parent=1 // pred_fallthru
      _
    // Predicated region
    $region10: #{tpu_custom_call.1} parent=1 // pred_check
      _
    $region11: #{tpu_custom_call.1} parent=1 // pred_check_branch
      %18 = sbr.rel (0) target = $region13
    $region12: #{tpu_custom_call.1} parent=1 // pred_region
      _
    $region13: #{tpu_custom_call.1} parent=1 // pred_fallthru
      _
    // Predicated region
    $region14: #{tpu_custom_call.1} parent=1 // pred_check
      _
    $region15: #{tpu_custom_call.1} parent=1 // pred_check_branch
      %20 = sbr.rel (0) target = $region17
    $region16: #{tpu_custom_call.1} parent=1 // pred_region
      _
    $region17: #{tpu_custom_call.1} parent=1 // pred_fallthru
      _
    // Predicated region
    $region18: #{tpu_custom_call.1} parent=1 // pred_check
      _
    $region19: #{tpu_custom_call.1} parent=1 // pred_check_branch
      %22 = sbr.rel (0) target = $region21
    $region20: #{tpu_custom_call.1} parent=1 // pred_region
      _
    $region21: #{tpu_custom_call.1} parent=1 // pred_fallthru
      _
    // Predicated region
    $region22: #{tpu_custom_call.1} parent=1 // pred_check
      _
    $region23: #{tpu_custom_call.1} parent=1 // pred_check_branch
      %24 = sbr.rel (0) target = $region25
    $region24: #{tpu_custom_call.1} parent=1 // pred_region
      _
    $region25: #{tpu_custom_call.1} parent=1 // pred_fallthru
      _
    %v25 = vld [vmem:[%s1] sm:$0x3]
    %v26 = vld [vmem:[%s2] sm:$0xff]
    %v27 = vld [vmem:[%s2 + $0x8] sm:$0xff]
    %v28 = vld [vmem:[%s2 + $0x10] sm:$0xff]
    %v29 = vld [vmem:[%s2 + $0x18] sm:$0xff]
    %31 = vset.pattern.permute.xlu0 0
    %32 = vperm.xlu0 %31, %v26
    %v33 = vpop.permute.xlu0 %32
    %36 = vset.pattern.permute.xlu0 0
    %37 = vperm.xlu0 %36, %v27
    %v38 = vpop.permute.xlu0 %37
    %41 = vset.pattern.permute.xlu0 0
    %42 = vperm.xlu0 %41, %v28
    %v43 = vpop.permute.xlu0 %42
    %46 = vset.pattern.permute.xlu0 0
    %47 = vperm.xlu0 %46, %v29
    %v48 = vpop.permute.xlu0 %47
    %v50 = vlaneseq
    %v51 = vshrl.u32 %v50, 7
    %v52 = vsub.s32 0, %v51
    %v53 = vrot.slane %v25, %v52
    %v54 = vmul.f32 %v33, %v53
    %v55 = vmul.f32 %v38, %v53
    %v56 = vmul.f32 %v43, %v53
    %v57 = vmul.f32 %v48, %v53
    %58 = vset.pattern.permute.xlu0 1
    %59 = vperm.xlu0 %58, %v26
    %v60 = vpop.permute.xlu0 %59
    %62 = vset.pattern.permute.xlu0 1
    %63 = vperm.xlu0 %62, %v27
    %v64 = vpop.permute.xlu0 %63
    %66 = vset.pattern.permute.xlu0 1
    %67 = vperm.xlu0 %66, %v28
    %v68 = vpop.permute.xlu0 %67
    %70 = vset.pattern.permute.xlu0 1
    %71 = vperm.xlu0 %70, %v29
    %v72 = vpop.permute.xlu0 %71
    %v74 = vlaneseq
    %v75 = vshrl.u32 %v74, 7
    %v76 = vsub.s32 1, %v75
    %v77 = vrot.slane %v25, %v76
    %v78 = vmul.f32 %v60, %v77
    %v79 = vmul.f32 %v64, %v77
    %v80 = vmul.f32 %v68, %v77
    %v81 = vmul.f32 %v72, %v77
    %v82 = vadd.f32 %v54, %v78
    %v83 = vadd.f32 %v55, %v79
    %v84 = vadd.f32 %v56, %v80
    %v85 = vadd.f32 %v57, %v81
    %v86 = vld [vmem:[%s3] sm:$0xff]
    %v87 = vld [vmem:[%s3 + $0x8] sm:$0xff]
    %v88 = vld [vmem:[%s3 + $0x10] sm:$0xff]
    %v89 = vld [vmem:[%s3 + $0x18] sm:$0xff]
    %91 = vset.pattern.permute.xlu0 0
    %92 = vperm.xlu0 %91, %v86
    %v93 = vpop.permute.xlu0 %92
    %96 = vset.pattern.permute.xlu0 0
    %97 = vperm.xlu0 %96, %v87
    %v98 = vpop.permute.xlu0 %97
    %101 = vset.pattern.permute.xlu0 0
    %102 = vperm.xlu0 %101, %v88
    %v103 = vpop.permute.xlu0 %102
    %106 = vset.pattern.permute.xlu0 0
    %107 = vperm.xlu0 %106, %v89
    %v108 = vpop.permute.xlu0 %107
    %v110 = vadd.f32 %v82, %v93
    %v111 = vadd.f32 %v83, %v98
    %v112 = vadd.f32 %v84, %v103
    %v113 = vadd.f32 %v85, %v108
    %v114 = vtanh.pop %v110
    %v115 = vtanh.pop %v111
    %v116 = vtanh.pop %v112
    %v117 = vtanh.pop %v113
    %v118 = vld [vmem:[%s4] sm:$0xff]
    %v119 = vld [vmem:[%s5] sm:$0xff]
    %121 = vset.pattern.permute.xlu0 0
    %122 = vperm.xlu0 %121, %v119
    %v123 = vpop.permute.xlu0 %122
    %vm125 = vcmask 261120
    %v127 = vsel %vm125, %v118, 0
    %129 = vmatprep.subr.mxu0 0.0
    %130 = vmatpush1.msra.mxu0 %v114
    %131 = vmatprep.subr.mxu0 0.0
    %132 = vmatpush1.msra.mxu0 %v115
    %133 = vmatprep.subr.mxu0 0.0
    %134 = vmatpush1.msra.mxu0 %v116
    %135 = vmatprep.subr.mxu0 0.0
    %136 = vmatpush1.msra.mxu0 %v117
    %137 = vmatprep.subr.mxu0 0.0
    %138 = vmatpush1.msra.mxu0 0.0
    %139 = vmatprep.subr.mxu0 0.0
    %140 = vmatpush1.msra.mxu0 0.0
    %141 = vmatprep.subr.mxu0 0.0
    %142 = vmatpush1.msra.mxu0 0.0
    %143 = vmatprep.subr.mxu0 0.0
    %144 = vmatpush1.msra.mxu0 0.0
    %145 = vmatprep.subr.mxu0 0.0
    %146 = vmatpush1.msra.mxu0 0.0
    %147 = vmatprep.subr.mxu0 0.0
    %148 = vmatpush1.msra.mxu0 0.0
    %149 = vmatprep.subr.mxu0 0.0
    %150 = vmatpush1.msra.mxu0 0.0
    %151 = vmatprep.subr.mxu0 0.0
    %152 = vmatpush1.msra.mxu0 0.0
    %153 = vmatprep.subr.mxu0 0.0
    %154 = vmatpush1.msra.mxu0 0.0
    %155 = vmatprep.subr.mxu0 0.0
    %156 = vmatpush1.msra.mxu0 0.0
    %157 = vmatprep.subr.mxu0 0.0
    %158 = vmatpush1.msra.mxu0 0.0
    %159 = vmatprep.subr.mxu0 0.0
    %160 = vmatpush1.msra.mxu0 0.0
    %161 = vmatprep.subr.mxu0 0.0
    %162 = vmatpush1.msra.mxu0 0.0
    %163 = vmatprep.subr.mxu0 0.0
    %164 = vmatpush1.msra.mxu0 0.0
    %165 = vmatprep.subr.mxu0 0.0
    %166 = vmatpush1.msra.mxu0 0.0
    %167 = vmatprep.subr.mxu0 0.0
    %168 = vmatpush1.msra.mxu0 0.0
    %169 = vmatprep.subr.mxu0 0.0
    %170 = vmatpush1.msra.mxu0 0.0
    %171 = vmatprep.subr.mxu0 0.0
    %172 = vmatpush1.msra.mxu0 0.0
    %173 = vmatprep.subr.mxu0 0.0
    %174 = vmatpush1.msra.mxu0 0.0
    %175 = vmatprep.subr.mxu0 0.0
    %176 = vmatpush1.msra.mxu0 0.0
    %177 = vmatprep.subr.mxu0 0.0
    %178 = vmatpush1.msra.mxu0 0.0
    %179 = vmatprep.subr.mxu0 0.0
    %180 = vmatpush1.msra.mxu0 0.0
    %181 = vmatprep.subr.mxu0 0.0
    %182 = vmatpush1.msra.mxu0 0.0
    %183 = vmatprep.subr.mxu0 0.0
    %184 = vmatpush1.msra.mxu0 0.0
    %185 = vmatprep.subr.mxu0 0.0
    %186 = vmatpush1.msra.mxu0 0.0
    %187 = vmatprep.subr.mxu0 0.0
    %188 = vmatpush1.msra.mxu0 0.0
    %189 = vmatprep.subr.mxu0 0.0
    %190 = vmatpush1.msra.mxu0 0.0
    %191 = vmatprep.subr.mxu0 0.0
    %192 = vmatpush1.msra.mxu0 0.0
    %193 = vmatprep.mubr.f32.mxu0 0.0
    %194 = vmatmul.mubr.f32.gmra.mrb[0].mxu0 %v127
    %v195 = vpop.f32.mrb[0].mxu0
    %v196 = vadd.f32 %v123, %v195
    %v197 = vpop.f32.mrb[0].mxu0
    %198 = vdwg.mxu0
    %v199 = vtanh.pop %v196
    %s200 = sld [smem:[#allocation2]]
    %v201 = vstv %s200
    %v202 = vmul.f32 %v199, %v201
    %203 = vst [vmem:[#allocation3] sm:$0x3] %v202
    // Predicated region
    $region26: #{tpu_custom_call.1} parent=1 // pred_check
      _
    $region27: #{tpu_custom_call.1} parent=1 // pred_check_branch
      %205 = sbr.rel (0) target = $region29
    $region28: #{tpu_custom_call.1} parent=1 // pred_region
      %s207 = ssub.s32 32, 32
      %208 = vsyncadd [#allocation4], %s207
      %s210 = sshll.u32 [#allocation3], 4
      %s211 = int_to_ptr.vmem [resolvable:$true] %s210
      %213 = dma.vmem_to_hbm [thread:$0]  %s211, 32, %s6, [#allocation4]
    $region29: #{tpu_custom_call.1} parent=1 // pred_fallthru
      _
    // Predicated region
    $region30: #{tpu_custom_call.1} parent=1 // pred_check
      _
    $region31: #{tpu_custom_call.1} parent=1 // pred_check_branch
      %215 = sbr.rel (0) target = $region33
    $region32: #{tpu_custom_call.1} parent=1 // pred_region
      %216 = dma.done [#allocation4], 32
    $region33: #{tpu_custom_call.1} parent=1 // pred_fallthru
      _
    %217 = vsyncpa [#allocation4], 1

</llo_original>
